<compile_context>
chip_gen: v6e
topology: v6e:2x2x1
jax: 0.10.0
libtpu: 0.0.40
codegen_flags: <defaults>
</compile_context>

<pallas_src>
import jax
import jax.numpy as jnp
from jax.experimental import pallas as pl
from jax.experimental.pallas import tpu as pltpu

IN_FEATURES = 2
OUT_FEATURES = 1

SPL = 128              # samples per row of the lane-dense view (lane axis)
ROW_PAD = 8 * SPL      # pad N so the (R, 256) view has 8-aligned row count
TM_MAX = 4096          # max rows per grid step (512K samples, ~12 MiB dbl-buffered)


def _round_up(v, m):
    return ((v + m - 1) // m) * m


def _linreg_kernel(b_ref, wb_ref, x_ref, o_ref):
    # b_ref : (1,)        f32 SMEM   bias scalar
    # wb_ref: (256, 128)  f32 VMEM   de-interleaving weight matrix (resident)
    # x_ref : (TM, 256)   f32 VMEM   128 interleaved (x0, x1) samples per row
    # o_ref : (TM, 128)   f32 VMEM   y for the same 128 samples per row
    o_ref[...] = (
        jnp.dot(x_ref[...], wb_ref[...], preferred_element_type=jnp.float32)
        + b_ref[0]
    ).astype(o_ref.dtype)


@jax.jit
def linear_regression_forward(x, weight, bias):
    """
    x:      (N, 2)  float32
    weight: (1, 2)  float32   (PyTorch nn.Linear layout: (out, in))
    bias:   (1,)    float32
    returns (N, 1)  float32
    """
    n, k = x.shape
    assert k == IN_FEATURES

    x = x.astype(jnp.float32)
    w = weight.astype(jnp.float32)
    b = bias.reshape(-1).astype(jnp.float32)

    # Pad rows so the lane-dense view has an 8-aligned number of rows.
    n_pad = _round_up(max(n, ROW_PAD), ROW_PAD)
    if n_pad != n:
        x = jnp.pad(x, ((0, n_pad - n), (0, 0)))

    # Pure row-major reshape (no transpose): row r holds samples
    # [128r, 128r+128) interleaved as [x0, x1, x0, x1, ...] across 256 lanes.
    r = n_pad // SPL
    xv = x.reshape(r, 2 * SPL)

    # Constant de-interleaving weight matrix: Wb[2c, c] = w00, Wb[2c+1, c] = w01,
    # so (xv @ Wb)[row, c] == x0*w00 + x1*w01 for sample 128*row + c.
    eye = jnp.eye(SPL, dtype=jnp.float32)
    wb = jnp.stack([eye * w[0, 0], eye * w[0, 1]], axis=1).reshape(2 * SPL, SPL)

    # Adaptive row tile: as large as possible (amortize per-step overhead)
    # while keeping >= 2 grid blocks so both v7x TensorCores get work.
    tm = max(8, min(TM_MAX, _round_up((r + 1) // 2, 8)))
    grid = (pl.cdiv(r, tm),)

    out = pl.pallas_call(
        _linreg_kernel,
        out_shape=jax.ShapeDtypeStruct((r, SPL), jnp.float32),
        grid=grid,
        in_specs=[
            pl.BlockSpec(memory_space=pltpu.MemorySpace.SMEM),   # bias scalar
            pl.BlockSpec((2 * SPL, SPL), lambda i: (0, 0)),      # Wb (resident)
            pl.BlockSpec((tm, 2 * SPL), lambda i: (i, 0)),       # x tile
        ],
        out_specs=pl.BlockSpec((tm, SPL), lambda i: (i, 0)),
        compiler_params=pltpu.CompilerParams(
            dimension_semantics=("parallel",),   # shard row tiles across TCs
            vmem_limit_bytes=32 * 1024 * 1024,   # fits TM_MAX dbl-buffered tiles
        ),
    )(b, wb, xv)

    # Row-major flatten of (r, 128) is exactly y in sample order; drop padding.
    return out.reshape(-1)[:n].reshape(n, OUT_FEATURES)


def init_params(key):
    """Deterministic init mimicking nn.Linear(2, 1): U(-1/sqrt(in), 1/sqrt(in))."""
    kw, kb = jax.random.split(key)
    bound = 1.0 / jnp.sqrt(jnp.float32(IN_FEATURES))
    weight = jax.random.uniform(
        kw, (OUT_FEATURES, IN_FEATURES), jnp.float32, -bound, bound
    )
    bias = jax.random.uniform(kb, (OUT_FEATURES,), jnp.float32, -bound, bound)
    return weight, bias


if __name__ == "__main__":
    key = jax.random.PRNGKey(0)
    k_params, k_x, k_x2 = jax.random.split(key, 3)

    weight, bias = init_params(k_params)

    # Small batch.
    N = 8
    x = jax.random.normal(k_x, (N, IN_FEATURES), jnp.float32)
    y = jax.block_until_ready(linear_regression_forward(x, weight, bias))
    y_ref = x @ weight.T + bias
    assert y.shape == (N, OUT_FEATURES)
    assert jnp.allclose(y, y_ref, atol=1e-5, rtol=1e-5)

    # Ragged batch (not a multiple of 8 or 128) to exercise row padding.
    N2 = 300
    x2 = jax.random.normal(k_x2, (N2, IN_FEATURES), jnp.float32)
    y2 = jax.block_until_ready(linear_regression_forward(x2, weight, bias))
    y2_ref = x2 @ weight.T + bias
    assert y2.shape == (N2, OUT_FEATURES)
    assert jnp.allclose(y2, y2_ref, atol=1e-5, rtol=1e-5)

    print("KERNEL_OK")
</pallas_src>

<mosaic_0001>
module attributes {stable_mosaic.version = 11 : i64} {
  func.func @_linreg_kernel(%arg0: i32, %arg1: memref<1xf32, #tpu.memory_space<smem>>, %arg2: memref<256x128xf32, #tpu.memory_space<vmem>>, %arg3: memref<8x256xf32, #tpu.memory_space<vmem>>, %arg4: memref<8x128xf32, #tpu.memory_space<vmem>>) attributes {dimension_semantics = [#tpu.dimension_semantics<parallel>], iteration_bounds = array<i64: 1>, scalar_prefetch = 0 : i64, scratch_operands = 0 : i64, tpu.core_type = #tpu.core_type<tc>, window_params = [{transform_indices = @transform_0, window_bounds = array<i64: 1>}, {pipeline_mode = #tpu.pipeline_mode<synchronous>, transform_indices = @transform_1, window_bounds = array<i64: 256, 128>}, {transform_indices = @transform_2, window_bounds = array<i64: 8, 256>}, {transform_indices = @transform_3, window_bounds = array<i64: 8, 128>}]} {
    %c0 = arith.constant 0 : index
    %c0_0 = arith.constant 0 : index
    %0 = vector.load %arg3[%c0, %c0_0] : memref<8x256xf32, #tpu.memory_space<vmem>>, vector<8x256xf32>
    %c0_1 = arith.constant 0 : index
    %c0_2 = arith.constant 0 : index
    %1 = vector.load %arg2[%c0_1, %c0_2] : memref<256x128xf32, #tpu.memory_space<vmem>>, vector<256x128xf32>
    %cst = arith.constant dense<0.000000e+00> : vector<8x128xf32>
    %2 = tpu.matmul %0, %1, %cst {dimension_numbers = #tpu.dot_dimension_numbers<[1], [0], [0], [1], [0, 0, 1, 1], [], []>} : vector<8x256xf32>, vector<256x128xf32>, vector<8x128xf32> -> vector<8x128xf32>
    %c0_3 = arith.constant 0 : index
    %3 = memref.load %arg1[%c0_3] : memref<1xf32, #tpu.memory_space<smem>>
    %4 = vector.broadcast %3 : f32 to vector<8x128xf32>
    %5 = arith.addf %2, %4 : vector<8x128xf32>
    %c0_4 = arith.constant 0 : index
    %c0_5 = arith.constant 0 : index
    %6 = vector.load %arg4[%c0_4, %c0_5] : memref<8x128xf32, #tpu.memory_space<vmem>>, vector<8x128xf32>
    tpu.vector_store %arg4[%c0_4, %c0_5], %5 {strides = array<i32>} : memref<8x128xf32, #tpu.memory_space<vmem>>, vector<8x128xf32>,
    return
  }
  func.func @transform_0(%arg0: i32) -> i32 {
    %c0_i32 = arith.constant 0 : i32
    %c0_i32_0 = arith.constant 0 : i32
    return %c0_i32 : i32
  }
  func.func @transform_1(%arg0: i32) -> (i32, i32) {
    %c0_i32 = arith.constant 0 : i32
    %c0_i32_0 = arith.constant 0 : i32
    %c0_i32_1 = arith.constant 0 : i32
    return %c0_i32, %c0_i32_0 : i32, i32
  }
  func.func @transform_2(%arg0: i32) -> (i32, i32) {
    %c0_i32 = arith.constant 0 : i32
    %c0_i32_0 = arith.constant 0 : i32
    return %arg0, %c0_i32 : i32, i32
  }
  func.func @transform_3(%arg0: i32) -> (i32, i32) {
    %c0_i32 = arith.constant 0 : i32
    %c0_i32_0 = arith.constant 0 : i32
    return %arg0, %c0_i32 : i32, i32
  }
}

</mosaic_0001>

<llo_original>
// kernel: linear_regression_forward.1
$region0: #{linear_regression_forward.1}
  #allocation0 [shape = 'u32[]', space=smem, size = 0x4, offset = 0x4, fixed_abs, tag = 'smem constant byte address 0x4 - core index']
  #allocation1 [shape = 'u32[144,128]{1,0:T(1,128)}', space=vmem, size = 0x12000, scoped, tag = 'internal scratch']
  #allocation2 [shape = 'f32[1]{0:T(128)S(6)}', space=smem, size = 0x200, scoped, tag = 'scoped memory for linear_regression_forward.1']
  %s0 = inlined_call_operand.<no memory space> [shape: f32[1], index: 0, kind: input, shape index: {}]
  %s1 = inlined_call_operand.vmem [shape: f32[256,128], index: 1, kind: input, shape index: {}]
  %s2 = inlined_call_operand.vmem [shape: f32[8,256], index: 2, kind: input, shape index: {}]
  %s3 = inlined_call_operand.vmem [shape: f32[8,128], index: 3, kind: output, shape index: {}]
  %s4 = sld [smem:[#allocation0]]
  $region22: #{linear_regression_forward.1} parent=0
    _
  %s6 = ssub.s32 1, %s4
  %s7 = scalar_select 0, %s6, %s4
  %8 = sst [smem:[#allocation2]] %s0
  // Predicated region
  $region2: #{linear_regression_forward.1} parent=0 // pred_check
    _
  $region3: #{linear_regression_forward.1} parent=0 // pred_check_branch
    %10 = sbr.rel (0) target = $region5
  $region4: #{linear_regression_forward.1} parent=0 // pred_region
    _
  $region5: #{linear_regression_forward.1} parent=0 // pred_fallthru
    _
  // Predicated region
  $region6: #{linear_regression_forward.1} parent=0 // pred_check
    _
  $region7: #{linear_regression_forward.1} parent=0 // pred_check_branch
    %12 = sbr.rel (0) target = $region9
  $region8: #{linear_regression_forward.1} parent=0 // pred_region
    _
  $region9: #{linear_regression_forward.1} parent=0 // pred_fallthru
    _
  // Predicated region
  $region10: #{linear_regression_forward.1} parent=0 // pred_check
    _
  $region11: #{linear_regression_forward.1} parent=0 // pred_check_branch
    %14 = sbr.rel (0) target = $region13
  $region12: #{linear_regression_forward.1} parent=0 // pred_region
    _
  $region13: #{linear_regression_forward.1} parent=0 // pred_fallthru
    _
  %v15 = vld [vmem:[%s2] sm:$0xff]
  %v16 = vld [vmem:[%s2 + $0x8] sm:$0xff]
  %v17 = vld [vmem:[%s1] sm:$0xff]
  %v18 = vld [vmem:[%s1 + $0x8] sm:$0xff]
  %v19 = vld [vmem:[%s1 + $0x10] sm:$0xff]
  %v20 = vld [vmem:[%s1 + $0x18] sm:$0xff]
  %v21 = vld [vmem:[%s1 + $0x20] sm:$0xff]
  %v22 = vld [vmem:[%s1 + $0x28] sm:$0xff]
  %v23 = vld [vmem:[%s1 + $0x30] sm:$0xff]
  %v24 = vld [vmem:[%s1 + $0x38] sm:$0xff]
  %v25 = vld [vmem:[%s1 + $0x40] sm:$0xff]
  %v26 = vld [vmem:[%s1 + $0x48] sm:$0xff]
  %v27 = vld [vmem:[%s1 + $0x50] sm:$0xff]
  %v28 = vld [vmem:[%s1 + $0x58] sm:$0xff]
  %v29 = vld [vmem:[%s1 + $0x60] sm:$0xff]
  %v30 = vld [vmem:[%s1 + $0x68] sm:$0xff]
  %v31 = vld [vmem:[%s1 + $0x70] sm:$0xff]
  %v32 = vld [vmem:[%s1 + $0x78] sm:$0xff]
  %v33 = vld [vmem:[%s1 + $0x80] sm:$0xff]
  %v34 = vld [vmem:[%s1 + $0x88] sm:$0xff]
  %v35 = vld [vmem:[%s1 + $0x90] sm:$0xff]
  %v36 = vld [vmem:[%s1 + $0x98] sm:$0xff]
  %v37 = vld [vmem:[%s1 + $0xa0] sm:$0xff]
  %v38 = vld [vmem:[%s1 + $0xa8] sm:$0xff]
  %v39 = vld [vmem:[%s1 + $0xb0] sm:$0xff]
  %v40 = vld [vmem:[%s1 + $0xb8] sm:$0xff]
  %v41 = vld [vmem:[%s1 + $0xc0] sm:$0xff]
  %v42 = vld [vmem:[%s1 + $0xc8] sm:$0xff]
  %v43 = vld [vmem:[%s1 + $0xd0] sm:$0xff]
  %v44 = vld [vmem:[%s1 + $0xd8] sm:$0xff]
  %v45 = vld [vmem:[%s1 + $0xe0] sm:$0xff]
  %v46 = vld [vmem:[%s1 + $0xe8] sm:$0xff]
  %v47 = vld [vmem:[%s1 + $0xf0] sm:$0xff]
  %v48 = vld [vmem:[%s1 + $0xf8] sm:$0xff]
  %s49 = sld [smem:[#allocation2]]
  %v50 = vstv %s49
  %51 = vmatprep.subr.mxu0 0.0
  %52 = vmatpush1.msra.mxu0 %v32
  %53 = vmatprep.subr.mxu0 0.0
  %54 = vmatpush1.msra.mxu0 %v31
  %55 = vmatprep.subr.mxu0 0.0
  %56 = vmatpush1.msra.mxu0 %v30
  %57 = vmatprep.subr.mxu0 0.0
  %58 = vmatpush1.msra.mxu0 %v29
  %59 = vmatprep.subr.mxu0 0.0
  %60 = vmatpush1.msra.mxu0 %v28
  %61 = vmatprep.subr.mxu0 0.0
  %62 = vmatpush1.msra.mxu0 %v27
  %63 = vmatprep.subr.mxu0 0.0
  %64 = vmatpush1.msra.mxu0 %v26
  %65 = vmatprep.subr.mxu0 0.0
  %66 = vmatpush1.msra.mxu0 %v25
  %67 = vmatprep.subr.mxu0 0.0
  %68 = vmatpush1.msra.mxu0 %v24
  %69 = vmatprep.subr.mxu0 0.0
  %70 = vmatpush1.msra.mxu0 %v23
  %71 = vmatprep.subr.mxu0 0.0
  %72 = vmatpush1.msra.mxu0 %v22
  %73 = vmatprep.subr.mxu0 0.0
  %74 = vmatpush1.msra.mxu0 %v21
  %75 = vmatprep.subr.mxu0 0.0
  %76 = vmatpush1.msra.mxu0 %v20
  %77 = vmatprep.subr.mxu0 0.0
  %78 = vmatpush1.msra.mxu0 %v19
  %79 = vmatprep.subr.mxu0 0.0
  %80 = vmatpush1.msra.mxu0 %v18
  %81 = vmatprep.subr.mxu0 0.0
  %82 = vmatpush1.msra.mxu0 %v17
  %83 = vmatprep.subr.mxu0 0.0
  %84 = vmatpush2.msra.mxu0 %v48
  %85 = vmatprep.subr.mxu0 0.0
  %86 = vmatpush2.msra.mxu0 %v47
  %87 = vmatprep.subr.mxu0 0.0
  %88 = vmatpush2.msra.mxu0 %v46
  %89 = vmatprep.subr.mxu0 0.0
  %90 = vmatpush2.msra.mxu0 %v45
  %91 = vmatprep.subr.mxu0 0.0
  %92 = vmatpush2.msra.mxu0 %v44
  %93 = vmatprep.subr.mxu0 0.0
  %94 = vmatpush2.msra.mxu0 %v43
  %95 = vmatprep.subr.mxu0 0.0
  %96 = vmatpush2.msra.mxu0 %v42
  %97 = vmatprep.subr.mxu0 0.0
  %98 = vmatpush2.msra.mxu0 %v41
  %99 = vmatprep.subr.mxu0 0.0
  %100 = vmatpush2.msra.mxu0 %v40
  %101 = vmatprep.subr.mxu0 0.0
  %102 = vmatpush2.msra.mxu0 %v39
  %103 = vmatprep.subr.mxu0 0.0
  %104 = vmatpush2.msra.mxu0 %v38
  %105 = vmatprep.subr.mxu0 0.0
  %106 = vmatpush2.msra.mxu0 %v37
  %107 = vmatprep.subr.mxu0 0.0
  %108 = vmatpush2.msra.mxu0 %v36
  %109 = vmatprep.subr.mxu0 0.0
  %110 = vmatpush2.msra.mxu0 %v35
  %111 = vmatprep.subr.mxu0 0.0
  %112 = vmatpush2.msra.mxu0 %v34
  %113 = vmatprep.subr.mxu0 0.0
  %114 = vmatpush2.msra.mxu0 %v33
  %115 = vmatprep.mubr.f32.mxu0 %v16
  %116 = vmatmul.mubr.f32.gmra.mxu0 %v15
  %v117 = vpop.f32.mrf.mxu0
  %v118 = vadd.f32 %v50, %v117
  %v119 = vpop.f32.mrf.mxu0
  %120 = vdwg.mxu0
  %121 = vst [vmem:[%s3] sm:$0xff] %v118
  // Predicated region
  $region14: #{linear_regression_forward.1} parent=0 // pred_check
    _
  $region15: #{linear_regression_forward.1} parent=0 // pred_check_branch
    %123 = sbr.rel (0) target = $region17
  $region16: #{linear_regression_forward.1} parent=0 // pred_region
    _
  $region17: #{linear_regression_forward.1} parent=0 // pred_fallthru
    _
  // Predicated region
  $region18: #{linear_regression_forward.1} parent=0 // pred_check
    _
  $region19: #{linear_regression_forward.1} parent=0 // pred_check_branch
    %125 = sbr.rel (0) target = $region21
  $region20: #{linear_regression_forward.1} parent=0 // pred_region
    _
  $region21: #{linear_regression_forward.1} parent=0 // pred_fallthru
    _

</llo_original>
